<compile_context>
chip_gen: v6e
topology: v6e:2x2x1
jax: 0.10.0
libtpu: 0.0.40
codegen_flags: <defaults>
</compile_context>

<pallas_src>
import jax
import jax.numpy as jnp
from jax.experimental import pallas as pl
from jax.experimental.pallas import tpu as pltpu

BN_EPS = 1e-5


def model2_kernel(xcol_ref, w1_ref, b1_ref, w2_ref, b2_ref,
                  mask_ref, sel_ref, fw1_ref, fb1_ref, fw2_ref, fb2_ref,
                  out_ref):
    """One batch tile per grid step; channel-major layout (lanes = B_TILE*H*W)."""
    BHW = xcol_ref.shape[-1]

    # ---- conv1 (3,1) + folded BN1 + ReLU: one im2col GEMM ------------------
    # xcol block: [1, K16, BHW] bf16, im2col built in the wrapper.
    y1 = jnp.dot(w1_ref[...], xcol_ref[0],
                 preferred_element_type=jnp.float32)           # [C1, BHW] f32
    y1 = jnp.maximum(y1 + b1_ref[...], 0.0)

    # ---- conv2 (1,3) + folded BN2 + ReLU: roll + masks -> one im2col GEMM --
    # left tap = in[:, w-1]  : rotate lanes right by 1 (jnp.roll convention),
    # right tap = in[:, w+1] : rotate by BHW-1 (== -1); border / batch-boundary
    # lanes are zeroed by the precomputed masks, so the wrap-around is harmless.
    masks = mask_ref[...]                                      # [2, BHW] f32
    left = pltpu.roll(y1, 1, axis=1) * masks[0:1]
    right = pltpu.roll(y1, BHW - 1, axis=1) * masks[1:2]
    ycol = jnp.concatenate([left, y1, right], axis=0).astype(jnp.bfloat16)  # [3*C1, BHW]
    y2 = jnp.dot(w2_ref[...], ycol,
                 preferred_element_type=jnp.float32)           # [C2, BHW] f32
    y2 = jnp.maximum(y2 + b2_ref[...], 0.0)

    # ---- GAP for the whole tile: one NT GEMM against the 1/HW selector ------
    # pooled[b, c] = sum_s sel[b, s] * y2[c, s]   -> [B_TILE, C2] (f32, exact mean)
    pooled = jax.lax.dot_general(sel_ref[...], y2,
                                 (((1,), (1,)), ((), ())),
                                 preferred_element_type=jnp.float32)

    # ---- FC tail (kept in f32; negligible FLOPs) -----------------------------
    h = jnp.dot(pooled, fw1_ref[...],
                preferred_element_type=jnp.float32) + fb1_ref[...]     # [B_TILE, HID_P]
    # TODO(synk): dropout implemented as identity (eval-mode semantics).
    logits = jnp.dot(h, fw2_ref[...],
                     preferred_element_type=jnp.float32) + fb2_ref[...]  # [B_TILE, NC_P]

    # log_softmax over (padded) class lanes; padded classes carry -1e30 biases
    # so exp() underflows to exactly 0 in f32 and never perturbs the result.
    m = jnp.max(logits, axis=-1, keepdims=True)
    z = logits - m
    lse = jnp.log(jnp.sum(jnp.exp(z), axis=-1, keepdims=True))
    out_ref[0] = z - lse


def model2_forward(x_nchw, kp, num_classes, b_tile=None):
    B, T, H, W = x_nchw.shape
    HW = H * W
    if b_tile is None:
        b_tile = min(B, 128)              # working set ~150 KB/sample: VMEM is a non-issue
    num_tiles = -(-B // b_tile)
    B_pad = num_tiles * b_tile

    C1 = kp["w1f"].shape[0]
    K_pad = kp["w1f"].shape[1]            # 3*T padded to 16
    C2 = kp["w2f"].shape[0]
    HID_P = kp["fw1p"].shape[1]
    NC_P = kp["fw2p"].shape[1]
    K = 3 * T
    BHW = b_tile * HW

    # conv1 im2col in the wrapper: [num_tiles, K_pad, b_tile*HW] bf16.
    xp = jnp.pad(x_nchw, ((0, B_pad - B), (0, 0), (1, 1), (0, 0)))        # pad batch + H
    taps = jnp.stack([xp[:, :, kh:kh + H, :] for kh in range(3)], axis=1)  # [B_pad,3,T,H,W]
    xcol = taps.reshape(B_pad, K, HW)
    xcol = jnp.pad(xcol, ((0, 0), (0, K_pad - K), (0, 0)))
    xcol = xcol.reshape(num_tiles, b_tile, K_pad, HW).transpose(0, 2, 1, 3)
    xcol = xcol.reshape(num_tiles, K_pad, BHW).astype(jnp.bfloat16)

    # conv2 border masks and GAP selector: resident constants (constant index maps).
    lane = jnp.arange(BHW, dtype=jnp.int32)
    w_idx = lane % W
    masks = jnp.stack([(w_idx != 0).astype(jnp.float32),
                       (w_idx != W - 1).astype(jnp.float32)], axis=0)      # [2, BHW]
    sel = ((lane[None, :] // HW) ==
           jnp.arange(b_tile, dtype=jnp.int32)[:, None]).astype(jnp.float32) / HW  # [b_tile, BHW]

    out = pl.pallas_call(
        model2_kernel,
        out_shape=jax.ShapeDtypeStruct((num_tiles, b_tile, NC_P), jnp.float32),
        grid=(num_tiles,),
        in_specs=[
            pl.BlockSpec((1, K_pad, BHW), lambda i: (i, 0, 0)),   # per-tile im2col input
            pl.BlockSpec((C1, K_pad), lambda i: (0, 0)),          # BN1-folded conv1 weight
            pl.BlockSpec((C1, 1), lambda i: (0, 0)),              # folded conv1 bias
            pl.BlockSpec((C2, 3 * C1), lambda i: (0, 0)),         # BN2-folded conv2 weight
            pl.BlockSpec((C2, 1), lambda i: (0, 0)),              # folded conv2 bias
            pl.BlockSpec((2, BHW), lambda i: (0, 0)),             # conv2 border masks
            pl.BlockSpec((b_tile, BHW), lambda i: (0, 0)),        # GAP 1/HW selector
            pl.BlockSpec((C2, HID_P), lambda i: (0, 0)),          # fc1 weight (padded, f32)
            pl.BlockSpec((1, HID_P), lambda i: (0, 0)),           # fc1 bias (padded)
            pl.BlockSpec((HID_P, NC_P), lambda i: (0, 0)),        # fc2 weight (padded, f32)
            pl.BlockSpec((1, NC_P), lambda i: (0, 0)),            # fc2 bias (-1e30 pad)
        ],
        out_specs=pl.BlockSpec((1, b_tile, NC_P), lambda i: (i, 0, 0)),
        compiler_params=pltpu.CompilerParams(
            dimension_semantics=("parallel",) if num_tiles > 1 else ("arbitrary",)),
    )(xcol, kp["w1f"], kp["b1f"], kp["w2f"], kp["b2f"], masks, sel,
      kp["fw1p"], kp["fb1p"], kp["fw2p"], kp["fb2p"])
    return out.reshape(B_pad, NC_P)[:B, :num_classes]


def init_torch_params(key, T, C1, C2, HID, NC):
    """Deterministic params in PyTorch layouts (conv OIHW, linear [out, in])."""
    ks = jax.random.split(key, 16)
    f32 = jnp.float32
    n = lambda k, s: 0.1 * jax.random.normal(k, s, f32)
    return dict(
        w1=n(ks[0], (C1, T, 3, 1)), b1=n(ks[1], (C1,)),
        g1=1.0 + n(ks[2], (C1,)), beta1=n(ks[3], (C1,)),
        rm1=n(ks[4], (C1,)), rv1=0.5 + jnp.abs(jax.random.normal(ks[5], (C1,), f32)),
        w2=n(ks[6], (C2, C1, 1, 3)), b2=n(ks[7], (C2,)),
        g2=1.0 + n(ks[8], (C2,)), beta2=n(ks[9], (C2,)),
        rm2=n(ks[10], (C2,)), rv2=0.5 + jnp.abs(jax.random.normal(ks[11], (C2,), f32)),
        fw1=n(ks[12], (HID, C2)), fb1=n(ks[13], (HID,)),
        fw2=n(ks[14], (NC, HID)), fb2=n(ks[15], (NC,)),
    )


def pack_params(p, T, C1, C2, HID, NC, k1_pad=16, hid_pad=128, nc_pad=128):
    """Fold BN into conv weights, reshape for im2col GEMMs, pad FC dims to 128."""
    s1 = p["g1"] * jax.lax.rsqrt(p["rv1"] + BN_EPS)            # [C1]
    s2 = p["g2"] * jax.lax.rsqrt(p["rv2"] + BN_EPS)            # [C2]
    # conv1 [C1, T, 3, 1] -> [C1, 3*T] (row kh*T + t, matches wrapper im2col), K padded to 16.
    w1c = jnp.transpose(p["w1"][:, :, :, 0], (0, 2, 1)).reshape(C1, 3 * T)
    w1f = jnp.zeros((C1, k1_pad), jnp.float32).at[:, :3 * T].set(w1c * s1[:, None])
    b1f = ((p["b1"] - p["rm1"]) * s1 + p["beta1"]).reshape(C1, 1)
    # conv2 [C2, C1, 1, 3] -> [C2, 3*C1] (row kw*C1 + c1, matches ycol = [left, center, right]).
    w2c = jnp.transpose(p["w2"][:, :, 0, :], (0, 2, 1)).reshape(C2, 3 * C1)
    w2f = (w2c * s2[:, None]).astype(jnp.bfloat16)
    b2f = ((p["b2"] - p["rm2"]) * s2 + p["beta2"]).reshape(C2, 1)
    # fc1 [HID, C2] -> [C2, HID_P]; fc2 [NC, HID] -> [HID_P, NC_P] (zero-padded, kept f32).
    fw1p = jnp.zeros((C2, hid_pad), jnp.float32).at[:, :HID].set(p["fw1"].T)
    fb1p = jnp.zeros((1, hid_pad), jnp.float32).at[0, :HID].set(p["fb1"])
    fw2p = jnp.zeros((hid_pad, nc_pad), jnp.float32).at[:HID, :NC].set(p["fw2"].T)
    fb2p = jnp.full((1, nc_pad), -1e30, jnp.float32).at[0, :NC].set(p["fb2"])
    return dict(w1f=w1f.astype(jnp.bfloat16), b1f=b1f, w2f=w2f, b2f=b2f,
                fw1p=fw1p, fb1p=fb1p, fw2p=fw2p, fb2p=fb2p)


def model2_reference(x, p):
    """Pure-JAX/XLA reference of the PyTorch forward (eval mode), f32 end-to-end."""
    def bn(y, g, beta, rm, rv):
        s = (g * jax.lax.rsqrt(rv + BN_EPS))[None, :, None, None]
        return (y - rm[None, :, None, None]) * s + beta[None, :, None, None]
    y = jax.lax.conv_general_dilated(x, p["w1"], (1, 1), "SAME",
                                     dimension_numbers=("NCHW", "OIHW", "NCHW"))
    y = jnp.maximum(bn(y + p["b1"][None, :, None, None],
                       p["g1"], p["beta1"], p["rm1"], p["rv1"]), 0.0)
    y = jax.lax.conv_general_dilated(y, p["w2"], (1, 1), "SAME",
                                     dimension_numbers=("NCHW", "OIHW", "NCHW"))
    y = jnp.maximum(bn(y + p["b2"][None, :, None, None],
                       p["g2"], p["beta2"], p["rm2"], p["rv2"]), 0.0)
    pooled = jnp.mean(y, axis=(2, 3))
    h = pooled @ p["fw1"].T + p["fb1"]
    logits = h @ p["fw2"].T + p["fb2"]
    return jax.nn.log_softmax(logits, axis=-1)


if __name__ == "__main__":
    key = jax.random.PRNGKey(0)
    kx, kparam = jax.random.split(key)

    # input_shape = (B, T, C, W) -> conv channels = T = 4, spatial 16x16, B = 2
    B, T, H, W = 2, 4, 16, 16
    C1, C2, HID, NC = 16, 32, 100, 10

    x = jax.random.normal(kx, (B, T, H, W), jnp.float32)
    torch_params = init_torch_params(kparam, T, C1, C2, HID, NC)
    packed = pack_params(torch_params, T, C1, C2, HID, NC)

    out = jax.block_until_ready(model2_forward(x, packed, NC))

    assert out.shape == (B, NC)
    # rows of log_softmax must exponentiate-sum to 1
    row_sums = jnp.sum(jnp.exp(out), axis=1)
    assert bool(jnp.all(jnp.abs(row_sums - 1.0) < 1e-3))
    # and match the pure-JAX reference (bf16 MXU conv operands; f32 FC tail)
    ref = jax.block_until_ready(model2_reference(x, torch_params))
    assert bool(jnp.max(jnp.abs(out - ref)) < 0.05)

    print("KERNEL_OK")
</pallas_src>

<mosaic_0001>
module attributes {stable_mosaic.version = 11 : i64} {
  func.func @model2_kernel(%arg0: i32, %arg1: memref<1x16x512xbf16, #tpu.memory_space<vmem>>, %arg2: memref<16x16xbf16, #tpu.memory_space<vmem>>, %arg3: memref<16x1xf32, #tpu.memory_space<vmem>>, %arg4: memref<32x48xbf16, #tpu.memory_space<vmem>>, %arg5: memref<32x1xf32, #tpu.memory_space<vmem>>, %arg6: memref<2x512xf32, #tpu.memory_space<vmem>>, %arg7: memref<2x512xf32, #tpu.memory_space<vmem>>, %arg8: memref<32x128xf32, #tpu.memory_space<vmem>>, %arg9: memref<1x128xf32, #tpu.memory_space<vmem>>, %arg10: memref<128x128xf32, #tpu.memory_space<vmem>>, %arg11: memref<1x128xf32, #tpu.memory_space<vmem>>, %arg12: memref<1x2x128xf32, #tpu.memory_space<vmem>>) attributes {dimension_semantics = [#tpu.dimension_semantics<arbitrary>], iteration_bounds = array<i64: 1>, scalar_prefetch = 0 : i64, scratch_operands = 0 : i64, tpu.core_type = #tpu.core_type<tc>, window_params = [{transform_indices = @transform_0, window_bounds = array<i64: 1, 16, 512>}, {pipeline_mode = #tpu.pipeline_mode<synchronous>, transform_indices = @transform_1, window_bounds = array<i64: 16, 16>}, {pipeline_mode = #tpu.pipeline_mode<synchronous>, transform_indices = @transform_2, window_bounds = array<i64: 16, 1>}, {pipeline_mode = #tpu.pipeline_mode<synchronous>, transform_indices = @transform_3, window_bounds = array<i64: 32, 48>}, {pipeline_mode = #tpu.pipeline_mode<synchronous>, transform_indices = @transform_4, window_bounds = array<i64: 32, 1>}, {pipeline_mode = #tpu.pipeline_mode<synchronous>, transform_indices = @transform_5, window_bounds = array<i64: 2, 512>}, {pipeline_mode = #tpu.pipeline_mode<synchronous>, transform_indices = @transform_6, window_bounds = array<i64: 2, 512>}, {pipeline_mode = #tpu.pipeline_mode<synchronous>, transform_indices = @transform_7, window_bounds = array<i64: 32, 128>}, {pipeline_mode = #tpu.pipeline_mode<synchronous>, transform_indices = @transform_8, window_bounds = array<i64: 1, 128>}, {pipeline_mode = #tpu.pipeline_mode<synchronous>, transform_indices = @transform_9, window_bounds = array<i64: 128, 128>}, {pipeline_mode = #tpu.pipeline_mode<synchronous>, transform_indices = @transform_10, window_bounds = array<i64: 1, 128>}, {transform_indices = @transform_11, window_bounds = array<i64: 1, 2, 128>}]} {
    %c0 = arith.constant 0 : index
    %c0_0 = arith.constant 0 : index
    %0 = vector.load %arg2[%c0, %c0_0] : memref<16x16xbf16, #tpu.memory_space<vmem>>, vector<16x16xbf16>
    %c0_1 = arith.constant 0 : index
    %c0_2 = arith.constant 0 : index
    %c0_3 = arith.constant 0 : index
    %1 = vector.load %arg1[%c0_1, %c0_2, %c0_3] : memref<1x16x512xbf16, #tpu.memory_space<vmem>>, vector<1x16x512xbf16>
    %2 = vector.shape_cast %1 : vector<1x16x512xbf16> to vector<16x512xbf16>
    %cst = arith.constant dense<0.000000e+00> : vector<16x512xf32>
    %3 = tpu.matmul %0, %2, %cst {dimension_numbers = #tpu.dot_dimension_numbers<[1], [0], [0], [1], [0, 0, 1, 1], [], []>} : vector<16x16xbf16>, vector<16x512xbf16>, vector<16x512xf32> -> vector<16x512xf32>
    %c0_4 = arith.constant 0 : index
    %c0_5 = arith.constant 0 : index
    %4 = vector.load %arg3[%c0_4, %c0_5] : memref<16x1xf32, #tpu.memory_space<vmem>>, vector<16x1xf32>
    %5 = vector.broadcast %4 : vector<16x1xf32> to vector<16x512xf32>
    %6 = arith.addf %3, %5 : vector<16x512xf32>
    %cst_6 = arith.constant 0.000000e+00 : f32
    %7 = vector.broadcast %cst_6 : f32 to vector<16x512xf32>
    %8 = arith.maximumf %6, %7 : vector<16x512xf32>
    %c0_7 = arith.constant 0 : index
    %c0_8 = arith.constant 0 : index
    %9 = vector.load %arg6[%c0_7, %c0_8] : memref<2x512xf32, #tpu.memory_space<vmem>>, vector<2x512xf32>
    %c1_i32 = arith.constant 1 : i32
    %10 = tpu.dynamic_rotate %8 by %c1_i32 dim 1 : vector<16x512xf32>, i32 -> vector<16x512xf32>
    %11 = vector.extract_strided_slice %9 {offsets = [0, 0], sizes = [1, 512], strides = [1, 1]} : vector<2x512xf32> to vector<1x512xf32>
    %12 = vector.broadcast %11 : vector<1x512xf32> to vector<16x512xf32>
    %13 = arith.mulf %10, %12 : vector<16x512xf32>
    %c511_i32 = arith.constant 511 : i32
    %14 = tpu.dynamic_rotate %8 by %c511_i32 dim 1 : vector<16x512xf32>, i32 -> vector<16x512xf32>
    %15 = vector.extract_strided_slice %9 {offsets = [1, 0], sizes = [1, 512], strides = [1, 1]} : vector<2x512xf32> to vector<1x512xf32>
    %16 = vector.broadcast %15 : vector<1x512xf32> to vector<16x512xf32>
    %17 = arith.mulf %14, %16 : vector<16x512xf32>
    %18 = tpu.concatenate %13, %8, %17 in 0 : vector<16x512xf32>, vector<16x512xf32>, vector<16x512xf32> -> vector<48x512xf32>
    %19 = arith.truncf %18 : vector<48x512xf32> to vector<48x512xbf16>
    %c0_9 = arith.constant 0 : index
    %c0_10 = arith.constant 0 : index
    %20 = vector.load %arg4[%c0_9, %c0_10] : memref<32x48xbf16, #tpu.memory_space<vmem>>, vector<32x48xbf16>
    %cst_11 = arith.constant dense<0.000000e+00> : vector<32x512xf32>
    %21 = tpu.matmul %20, %19, %cst_11 {dimension_numbers = #tpu.dot_dimension_numbers<[1], [0], [0], [1], [0, 0, 1, 1], [], []>} : vector<32x48xbf16>, vector<48x512xbf16>, vector<32x512xf32> -> vector<32x512xf32>
    %c0_12 = arith.constant 0 : index
    %c0_13 = arith.constant 0 : index
    %22 = vector.load %arg5[%c0_12, %c0_13] : memref<32x1xf32, #tpu.memory_space<vmem>>, vector<32x1xf32>
    %23 = vector.broadcast %22 : vector<32x1xf32> to vector<32x512xf32>
    %24 = arith.addf %21, %23 : vector<32x512xf32>
    %cst_14 = arith.constant 0.000000e+00 : f32
    %25 = vector.broadcast %cst_14 : f32 to vector<32x512xf32>
    %26 = arith.maximumf %24, %25 : vector<32x512xf32>
    %c0_15 = arith.constant 0 : index
    %c0_16 = arith.constant 0 : index
    %27 = vector.load %arg7[%c0_15, %c0_16] : memref<2x512xf32, #tpu.memory_space<vmem>>, vector<2x512xf32>
    %cst_17 = arith.constant dense<0.000000e+00> : vector<2x32xf32>
    %28 = tpu.matmul %27, %26, %cst_17 {dimension_numbers = #tpu.dot_dimension_numbers<[1], [1], [0], [0], [0, 0, 1, 0], [], []>} : vector<2x512xf32>, vector<32x512xf32>, vector<2x32xf32> -> vector<2x32xf32>
    %c0_18 = arith.constant 0 : index
    %c0_19 = arith.constant 0 : index
    %29 = vector.load %arg8[%c0_18, %c0_19] : memref<32x128xf32, #tpu.memory_space<vmem>>, vector<32x128xf32>
    %cst_20 = arith.constant dense<0.000000e+00> : vector<2x128xf32>
    %30 = tpu.matmul %28, %29, %cst_20 {dimension_numbers = #tpu.dot_dimension_numbers<[1], [0], [0], [1], [0, 0, 1, 1], [], []>} : vector<2x32xf32>, vector<32x128xf32>, vector<2x128xf32> -> vector<2x128xf32>
    %c0_21 = arith.constant 0 : index
    %c0_22 = arith.constant 0 : index
    %31 = vector.load %arg9[%c0_21, %c0_22] : memref<1x128xf32, #tpu.memory_space<vmem>>, vector<1x128xf32>
    %32 = vector.broadcast %31 : vector<1x128xf32> to vector<2x128xf32>
    %33 = arith.addf %30, %32 : vector<2x128xf32>
    %c0_23 = arith.constant 0 : index
    %c0_24 = arith.constant 0 : index
    %34 = vector.load %arg10[%c0_23, %c0_24] : memref<128x128xf32, #tpu.memory_space<vmem>>, vector<128x128xf32>
    %cst_25 = arith.constant dense<0.000000e+00> : vector<2x128xf32>
    %35 = tpu.matmul %33, %34, %cst_25 {dimension_numbers = #tpu.dot_dimension_numbers<[1], [0], [0], [1], [0, 0, 1, 1], [], []>} : vector<2x128xf32>, vector<128x128xf32>, vector<2x128xf32> -> vector<2x128xf32>
    %c0_26 = arith.constant 0 : index
    %c0_27 = arith.constant 0 : index
    %36 = vector.load %arg11[%c0_26, %c0_27] : memref<1x128xf32, #tpu.memory_space<vmem>>, vector<1x128xf32>
    %37 = vector.broadcast %36 : vector<1x128xf32> to vector<2x128xf32>
    %38 = arith.addf %35, %37 : vector<2x128xf32>
    %cst_28 = arith.constant dense<0xFF800000> : vector<2xf32>
    %39 = vector.multi_reduction <maximumf>, %38, %cst_28 [1] : vector<2x128xf32> to vector<2xf32>
    %40 = vector.shape_cast %39 : vector<2xf32> to vector<2x1xf32>
    %41 = vector.broadcast %40 : vector<2x1xf32> to vector<2x128xf32>
    %42 = arith.subf %38, %41 : vector<2x128xf32>
    %43 = math.exp %42 : vector<2x128xf32>
    %cst_29 = arith.constant dense<0.000000e+00> : vector<2xf32>
    %44 = vector.multi_reduction <add>, %43, %cst_29 [1] : vector<2x128xf32> to vector<2xf32>
    %45 = vector.shape_cast %44 : vector<2xf32> to vector<2x1xf32>
    %46 = math.log %45 : vector<2x1xf32>
    %47 = vector.broadcast %46 : vector<2x1xf32> to vector<2x128xf32>
    %48 = arith.subf %42, %47 : vector<2x128xf32>
    %c0_30 = arith.constant 0 : index
    %c0_31 = arith.constant 0 : index
    %c0_32 = arith.constant 0 : index
    %49 = vector.load %arg12[%c0_30, %c0_31, %c0_32] : memref<1x2x128xf32, #tpu.memory_space<vmem>>, vector<1x2x128xf32>
    %50 = vector.shape_cast %49 : vector<1x2x128xf32> to vector<2x128xf32>
    %51 = vector.shape_cast %48 : vector<2x128xf32> to vector<1x2x128xf32>
    tpu.vector_store %arg12[%c0_30, %c0_31, %c0_32], %51 {strides = array<i32>} : memref<1x2x128xf32, #tpu.memory_space<vmem>>, vector<1x2x128xf32>,
    return
  }
  func.func @transform_0(%arg0: i32) -> (i32, i32, i32) {
    %c0_i32 = arith.constant 0 : i32
    %c0_i32_0 = arith.constant 0 : i32
    %c0_i32_1 = arith.constant 0 : i32
    return %arg0, %c0_i32, %c0_i32_0 : i32, i32, i32
  }
  func.func @transform_1(%arg0: i32) -> (i32, i32) {
    %c0_i32 = arith.constant 0 : i32
    %c0_i32_0 = arith.constant 0 : i32
    %c0_i32_1 = arith.constant 0 : i32
    return %c0_i32, %c0_i32_0 : i32, i32
  }
  func.func @transform_2(%arg0: i32) -> (i32, i32) {
    %c0_i32 = arith.constant 0 : i32
    %c0_i32_0 = arith.constant 0 : i32
    %c0_i32_1 = arith.constant 0 : i32
    return %c0_i32, %c0_i32_0 : i32, i32
  }
  func.func @transform_3(%arg0: i32) -> (i32, i32) {
    %c0_i32 = arith.constant 0 : i32
    %c0_i32_0 = arith.constant 0 : i32
    %c0_i32_1 = arith.constant 0 : i32
    return %c0_i32, %c0_i32_0 : i32, i32
  }
  func.func @transform_4(%arg0: i32) -> (i32, i32) {
    %c0_i32 = arith.constant 0 : i32
    %c0_i32_0 = arith.constant 0 : i32
    %c0_i32_1 = arith.constant 0 : i32
    return %c0_i32, %c0_i32_0 : i32, i32
  }
  func.func @transform_5(%arg0: i32) -> (i32, i32) {
    %c0_i32 = arith.constant 0 : i32
    %c0_i32_0 = arith.constant 0 : i32
    %c0_i32_1 = arith.constant 0 : i32
    return %c0_i32, %c0_i32_0 : i32, i32
  }
  func.func @transform_6(%arg0: i32) -> (i32, i32) {
    %c0_i32 = arith.constant 0 : i32
    %c0_i32_0 = arith.constant 0 : i32
    %c0_i32_1 = arith.constant 0 : i32
    return %c0_i32, %c0_i32_0 : i32, i32
  }
  func.func @transform_7(%arg0: i32) -> (i32, i32) {
    %c0_i32 = arith.constant 0 : i32
    %c0_i32_0 = arith.constant 0 : i32
    %c0_i32_1 = arith.constant 0 : i32
    return %c0_i32, %c0_i32_0 : i32, i32
  }
  func.func @transform_8(%arg0: i32) -> (i32, i32) {
    %c0_i32 = arith.constant 0 : i32
    %c0_i32_0 = arith.constant 0 : i32
    %c0_i32_1 = arith.constant 0 : i32
    return %c0_i32, %c0_i32_0 : i32, i32
  }
  func.func @transform_9(%arg0: i32) -> (i32, i32) {
    %c0_i32 = arith.constant 0 : i32
    %c0_i32_0 = arith.constant 0 : i32
    %c0_i32_1 = arith.constant 0 : i32
    return %c0_i32, %c0_i32_0 : i32, i32
  }
  func.func @transform_10(%arg0: i32) -> (i32, i32) {
    %c0_i32 = arith.constant 0 : i32
    %c0_i32_0 = arith.constant 0 : i32
    %c0_i32_1 = arith.constant 0 : i32
    return %c0_i32, %c0_i32_0 : i32, i32
  }
  func.func @transform_11(%arg0: i32) -> (i32, i32, i32) {
    %c0_i32 = arith.constant 0 : i32
    %c0_i32_0 = arith.constant 0 : i32
    %c0_i32_1 = arith.constant 0 : i32
    return %arg0, %c0_i32, %c0_i32_0 : i32, i32, i32
  }
}

</mosaic_0001>

<llo_original>
// kernel: tpu_custom_call.1
$region0: #{tpu_custom_call.1}
  #allocation0 [shape = 'u32[]', space=smem, size = 0x4, offset = 0x4, fixed_abs, tag = 'smem constant byte address 0x4 - core index']
  #allocation1 [shape = 'u32[144,128]{1,0:T(1,128)}', space=vmem, size = 0x12000, scoped, tag = 'internal scratch']
  %s0 = inlined_call_operand.vmem [shape: bf16[1,16,512], index: 0, kind: input, shape index: {}]
  %s1 = inlined_call_operand.hbm [shape: bf16[16,16], index: 1, kind: input, shape index: {}]
  %s2 = inlined_call_operand.vmem [shape: f32[16,1], index: 2, kind: input, shape index: {}]
  %s3 = inlined_call_operand.vmem [shape: bf16[32,48], index: 3, kind: input, shape index: {}]
  %s4 = inlined_call_operand.vmem [shape: f32[32,1], index: 4, kind: input, shape index: {}]
  %s5 = inlined_call_operand.vmem [shape: f32[2,512], index: 5, kind: input, shape index: {}]
  %s6 = inlined_call_operand.hbm [shape: f32[2,512], index: 6, kind: input, shape index: {}]
  %s7 = inlined_call_operand.hbm [shape: f32[32,128], index: 7, kind: input, shape index: {}]
  %s8 = inlined_call_operand.vmem [shape: f32[1,128], index: 8, kind: input, shape index: {}]
  %s9 = inlined_call_operand.hbm [shape: f32[128,128], index: 9, kind: input, shape index: {}]
  %s10 = inlined_call_operand.vmem [shape: f32[1,128], index: 10, kind: input, shape index: {}]
  %s11 = inlined_call_operand.hbm [shape: f32[1,2,128], index: 11, kind: output, shape index: {}]
  %s12 = sld [smem:[#allocation0]]
  $region70: #{tpu_custom_call.1} parent=0
    _
  %s14 = ssub.s32 1, %s12
  %s15 = scalar_select 0, %s14, %s12
  $region1: #{tpu_custom_call.1} parent=0
    #allocation2 [shape = 'u8[4096]{0}', space=vmem, size = 0x1000, scoped, tag = 'input window, operand 1, single buffered']
    #allocation3 [shape = 's32[1]{0}', space=sflag, size = 0x4, scoped, tag = 'scoped memory for tpu_custom_call.1']
    #allocation4 [shape = 's32[1]{0}', space=sflag, size = 0x4, scoped, tag = 'scoped memory for tpu_custom_call.1']
    #allocation5 [shape = 'u8[4096]{0}', space=vmem, size = 0x1000, scoped, tag = 'input window, operand 6, single buffered']
    #allocation6 [shape = 's32[1]{0}', space=sflag, size = 0x4, scoped, tag = 'scoped memory for tpu_custom_call.1']
    #allocation7 [shape = 'u8[16384]{0}', space=vmem, size = 0x4000, scoped, tag = 'input window, operand 7, single buffered']
    #allocation8 [shape = 'u8[65536]{0}', space=vmem, size = 0x10000, scoped, tag = 'input window, operand 9, single buffered']
    #allocation9 [shape = 's32[1]{0}', space=sflag, size = 0x4, scoped, tag = 'scoped memory for tpu_custom_call.1']
    #allocation10 [shape = 'u8[1024]{0}', space=vmem, size = 0x400, scoped, tag = 'output window, operand 0, single buffered']
    %16 = vsyncpa [#allocation3], 0
    %17 = vsyncpa [#allocation6], 0
    %18 = vsyncpa [#allocation9], 0
    %19 = vsyncpa [#allocation4], 0
    // Predicated region
    $region2: #{tpu_custom_call.1} parent=1 // pred_check
      _
    $region3: #{tpu_custom_call.1} parent=1 // pred_check_branch
      %21 = sbr.rel (0) target = $region5
    $region4: #{tpu_custom_call.1} parent=1 // pred_region
      _
    $region5: #{tpu_custom_call.1} parent=1 // pred_fallthru
      _
    // Predicated region
    $region6: #{tpu_custom_call.1} parent=1 // pred_check
      _
    $region7: #{tpu_custom_call.1} parent=1 // pred_check_branch
      %23 = sbr.rel (0) target = $region9
    $region8: #{tpu_custom_call.1} parent=1 // pred_region
      %s25 = ssub.s32 128, 128
      %26 = vsyncadd [#allocation3], %s25
      %s27 = sshll.u32 [#allocation2], 4
      %s28 = int_to_ptr.vmem [resolvable:$true] %s27
      %33 = dma.hbm_to_vmem [thread:$0]  %s1, 128, %s28, [#allocation3], 64, 64, 4
    $region9: #{tpu_custom_call.1} parent=1 // pred_fallthru
      _
    // Predicated region
    $region10: #{tpu_custom_call.1} parent=1 // pred_check
      _
    $region11: #{tpu_custom_call.1} parent=1 // pred_check_branch
      %35 = sbr.rel (0) target = $region13
    $region12: #{tpu_custom_call.1} parent=1 // pred_region
      _
    $region13: #{tpu_custom_call.1} parent=1 // pred_fallthru
      _
    // Predicated region
    $region14: #{tpu_custom_call.1} parent=1 // pred_check
      _
    $region15: #{tpu_custom_call.1} parent=1 // pred_check_branch
      %37 = sbr.rel (0) target = $region17
    $region16: #{tpu_custom_call.1} parent=1 // pred_region
      _
    $region17: #{tpu_custom_call.1} parent=1 // pred_fallthru
      _
    // Predicated region
    $region18: #{tpu_custom_call.1} parent=1 // pred_check
      _
    $region19: #{tpu_custom_call.1} parent=1 // pred_check_branch
      %39 = sbr.rel (0) target = $region21
    $region20: #{tpu_custom_call.1} parent=1 // pred_region
      _
    $region21: #{tpu_custom_call.1} parent=1 // pred_fallthru
      _
    // Predicated region
    $region22: #{tpu_custom_call.1} parent=1 // pred_check
      _
    $region23: #{tpu_custom_call.1} parent=1 // pred_check_branch
      %41 = sbr.rel (0) target = $region25
    $region24: #{tpu_custom_call.1} parent=1 // pred_region
      _
    $region25: #{tpu_custom_call.1} parent=1 // pred_fallthru
      _
    // Predicated region
    $region26: #{tpu_custom_call.1} parent=1 // pred_check
      _
    $region27: #{tpu_custom_call.1} parent=1 // pred_check_branch
      %43 = sbr.rel (0) target = $region29
    $region28: #{tpu_custom_call.1} parent=1 // pred_region
      %s45 = ssub.s32 128, 128
      %46 = vsyncadd [#allocation6], %s45
      %s48 = sshll.u32 [#allocation5], 4
      %s49 = int_to_ptr.vmem [resolvable:$true] %s48
      %51 = dma.hbm_to_vmem [thread:$0]  %s6, 128, %s49, [#allocation6]
    $region29: #{tpu_custom_call.1} parent=1 // pred_fallthru
      _
    // Predicated region
    $region30: #{tpu_custom_call.1} parent=1 // pred_check
      _
    $region31: #{tpu_custom_call.1} parent=1 // pred_check_branch
      %53 = sbr.rel (0) target = $region33
    $region32: #{tpu_custom_call.1} parent=1 // pred_region
      %s55 = ssub.s32 512, 512
      %56 = vsyncadd [#allocation6], %s55
      %s57 = sshll.u32 [#allocation7], 4
      %s58 = int_to_ptr.vmem [resolvable:$true] %s57
      %63 = dma.hbm_to_vmem [thread:$0]  %s7, 512, %s58, [#allocation6], 128, 128, 8
    $region33: #{tpu_custom_call.1} parent=1 // pred_fallthru
      _
    // Predicated region
    $region34: #{tpu_custom_call.1} parent=1 // pred_check
      _
    $region35: #{tpu_custom_call.1} parent=1 // pred_check_branch
      %65 = sbr.rel (0) target = $region37
    $region36: #{tpu_custom_call.1} parent=1 // pred_region
      _
    $region37: #{tpu_custom_call.1} parent=1 // pred_fallthru
      _
    // Predicated region
    $region38: #{tpu_custom_call.1} parent=1 // pred_check
      _
    $region39: #{tpu_custom_call.1} parent=1 // pred_check_branch
      %67 = sbr.rel (0) target = $region41
    $region40: #{tpu_custom_call.1} parent=1 // pred_region
      %s69 = ssub.s32 2048, 2048
      %70 = vsyncadd [#allocation9], %s69
      %s71 = sshll.u32 [#allocation8], 4
      %s72 = int_to_ptr.vmem [resolvable:$true] %s71
      %77 = dma.hbm_to_vmem [thread:$0]  %s9, 2048, %s72, [#allocation9], 128, 128, 8
    $region41: #{tpu_custom_call.1} parent=1 // pred_fallthru
      _
    // Predicated region
    $region42: #{tpu_custom_call.1} parent=1 // pred_check
      _
    $region43: #{tpu_custom_call.1} parent=1 // pred_check_branch
      %79 = sbr.rel (0) target = $region45
    $region44: #{tpu_custom_call.1} parent=1 // pred_region
      _
    $region45: #{tpu_custom_call.1} parent=1 // pred_fallthru
      _
    // Predicated region
    $region46: #{tpu_custom_call.1} parent=1 // pred_check
      _
    $region47: #{tpu_custom_call.1} parent=1 // pred_check_branch
      %81 = sbr.rel (0) target = $region49
    $region48: #{tpu_custom_call.1} parent=1 // pred_region
      %82 = dma.done [#allocation3], 128
    $region49: #{tpu_custom_call.1} parent=1 // pred_fallthru
      _
    // Predicated region
    $region50: #{tpu_custom_call.1} parent=1 // pred_check
      _
    $region51: #{tpu_custom_call.1} parent=1 // pred_check_branch
      %84 = sbr.rel (0) target = $region53
    $region52: #{tpu_custom_call.1} parent=1 // pred_region
      %85 = dma.done [#allocation6], 128
    $region53: #{tpu_custom_call.1} parent=1 // pred_fallthru
      _
    // Predicated region
    $region54: #{tpu_custom_call.1} parent=1 // pred_check
      _
    $region55: #{tpu_custom_call.1} parent=1 // pred_check_branch
      %87 = sbr.rel (0) target = $region57
    $region56: #{tpu_custom_call.1} parent=1 // pred_region
      %88 = dma.done [#allocation6], 512
    $region57: #{tpu_custom_call.1} parent=1 // pred_fallthru
      _
    // Predicated region
    $region58: #{tpu_custom_call.1} parent=1 // pred_check
      _
    $region59: #{tpu_custom_call.1} parent=1 // pred_check_branch
      %90 = sbr.rel (0) target = $region61
    $region60: #{tpu_custom_call.1} parent=1 // pred_region
      %91 = dma.done [#allocation9], 2048
    $region61: #{tpu_custom_call.1} parent=1 // pred_fallthru
      _
    %v93 = vld [vmem:[#allocation2] sm:$0xf]
    %v94 = vld [vmem:[#allocation2 + $0x4] sm:$0xf]
    %v95 = vld [vmem:[%s0] sm:$0xff]
    %v96 = vld [vmem:[%s0 + $0x8] sm:$0xff]
    %v97 = vld [vmem:[%s0 + $0x10] sm:$0xff]
    %v98 = vld [vmem:[%s0 + $0x18] sm:$0xff]
    %v99 = vld [vmem:[%s2] sm:$0xff]
    %v100 = vld [vmem:[%s2 + $0x8] sm:$0xff]
    %102 = vset.pattern.permute.xlu0 0
    %103 = vperm.xlu0 %102, %v99
    %v104 = vpop.permute.xlu0 %103
    %107 = vset.pattern.permute.xlu0 0
    %108 = vperm.xlu0 %107, %v100
    %v109 = vpop.permute.xlu0 %108
    %v113 = vunpack.c.l.b16 %v93
    %v114 = vunpack.c.l.b16 %v94
    %v115 = vpack.c.b16 %v114, %v113
    %v120 = vunpack.c.l.b16 %v95
    %v121 = vunpack.c.h.b16 %v95
    %v122 = vunpack.c.l.b16 %v96
    %v123 = vunpack.c.h.b16 %v96
    %v124 = vunpack.c.l.b16 %v97
    %v125 = vunpack.c.h.b16 %v97
    %v126 = vunpack.c.l.b16 %v98
    %v127 = vunpack.c.h.b16 %v98
    %v128 = vpack.c.b16 %v124, %v120
    %v129 = vpack.c.b16 %v125, %v121
    %v130 = vpack.c.b16 %v126, %v122
    %v131 = vpack.c.b16 %v127, %v123
    %vm136 = vcmask 130048
    %v138 = vsel %vm136, %v115, 0
    %140 = vmatprep.subr.bf16.mxu0 0
    %141 = vmatpush1.bf16.msra.mxu0 0
    %142 = vmatprep.subr.bf16.mxu0 0
    %143 = vmatpush1.bf16.msra.mxu0 0
    %144 = vmatprep.subr.bf16.mxu0 0
    %145 = vmatpush1.bf16.msra.mxu0 0
    %146 = vmatprep.subr.bf16.mxu0 0
    %147 = vmatpush1.bf16.msra.mxu0 0
    %148 = vmatprep.subr.bf16.mxu0 0
    %149 = vmatpush1.bf16.msra.mxu0 0
    %150 = vmatprep.subr.bf16.mxu0 0
    %151 = vmatpush1.bf16.msra.mxu0 0
    %152 = vmatprep.subr.bf16.mxu0 0
    %153 = vmatpush1.bf16.msra.mxu0 0
    %154 = vmatprep.subr.bf16.mxu0 %v129
    %155 = vmatpush1.bf16.msra.mxu0 %v128
    %156 = vmatprep.subr.bf16.mxu0 0
    %157 = vmatpush2.bf16.msra.mxu0 0
    %158 = vmatprep.subr.bf16.mxu0 0
    %159 = vmatpush2.bf16.msra.mxu0 0
    %160 = vmatprep.subr.bf16.mxu0 0
    %161 = vmatpush2.bf16.msra.mxu0 0
    %162 = vmatprep.subr.bf16.mxu0 0
    %163 = vmatpush2.bf16.msra.mxu0 0
    %164 = vmatprep.subr.bf16.mxu0 0
    %165 = vmatpush2.bf16.msra.mxu0 0
    %166 = vmatprep.subr.bf16.mxu0 0
    %167 = vmatpush2.bf16.msra.mxu0 0
    %168 = vmatprep.subr.bf16.mxu0 0
    %169 = vmatpush2.bf16.msra.mxu0 0
    %170 = vmatprep.subr.bf16.mxu0 0
    %171 = vmatpush2.bf16.msra.mxu0 0
    %172 = vmatprep.mubr.bf16.mxu0 0
    %173 = vmatmul.mubr.bf16.gmra.mxu0 %v138
    %v174 = vpop.f32.mrf.mxu0
    %v175 = vadd.f32 %v104, %v174
    %v176 = vpop.f32.mrf.mxu0
    %v177 = vadd.f32 %v104, %v176
    %v178 = vpop.f32.mrf.mxu0
    %v179 = vadd.f32 %v109, %v178
    %v180 = vpop.f32.mrf.mxu0
    %v181 = vadd.f32 %v109, %v180
    %182 = vdwg.mxu0
    %183 = vmatprep.subr.bf16.mxu0 0
    %184 = vmatpush1.bf16.msra.mxu0 0
    %185 = vmatprep.subr.bf16.mxu0 0
    %186 = vmatpush1.bf16.msra.mxu0 0
    %187 = vmatprep.subr.bf16.mxu0 0
    %188 = vmatpush1.bf16.msra.mxu0 0
    %189 = vmatprep.subr.bf16.mxu0 0
    %190 = vmatpush1.bf16.msra.mxu0 0
    %191 = vmatprep.subr.bf16.mxu0 0
    %192 = vmatpush1.bf16.msra.mxu0 0
    %193 = vmatprep.subr.bf16.mxu0 0
    %194 = vmatpush1.bf16.msra.mxu0 0
    %195 = vmatprep.subr.bf16.mxu0 0
    %196 = vmatpush1.bf16.msra.mxu0 0
    %197 = vmatprep.subr.bf16.mxu0 %v131
    %198 = vmatpush1.bf16.msra.mxu0 %v130
    %199 = vmatprep.subr.bf16.mxu0 0
    %200 = vmatpush2.bf16.msra.mxu0 0
    %201 = vmatprep.subr.bf16.mxu0 0
    %202 = vmatpush2.bf16.msra.mxu0 0
    %203 = vmatprep.subr.bf16.mxu0 0
    %204 = vmatpush2.bf16.msra.mxu0 0
    %205 = vmatprep.subr.bf16.mxu0 0
    %206 = vmatpush2.bf16.msra.mxu0 0
    %207 = vmatprep.subr.bf16.mxu0 0
    %208 = vmatpush2.bf16.msra.mxu0 0
    %209 = vmatprep.subr.bf16.mxu0 0
    %210 = vmatpush2.bf16.msra.mxu0 0
    %211 = vmatprep.subr.bf16.mxu0 0
    %212 = vmatpush2.bf16.msra.mxu0 0
    %213 = vmatprep.subr.bf16.mxu0 0
    %214 = vmatpush2.bf16.msra.mxu0 0
    %215 = vmatprep.mubr.bf16.mxu0 0
    %216 = vmatmul.mubr.bf16.gmra.mxu0 %v138
    %v217 = vpop.f32.mrf.mxu0
    %v218 = vadd.f32 %v104, %v217
    %v219 = vpop.f32.mrf.mxu0
    %v220 = vadd.f32 %v104, %v219
    %v221 = vpop.f32.mrf.mxu0
    %v222 = vadd.f32 %v109, %v221
    %v223 = vpop.f32.mrf.mxu0
    %v224 = vadd.f32 %v109, %v223
    %225 = vdwg.mxu0
    %v226 = vmax.f32 %v175, 0.0
    %v227 = vmax.f32 %v177, 0.0
    %v228 = vmax.f32 %v218, 0.0
    %v229 = vmax.f32 %v220, 0.0
    %v230 = vmax.f32 %v179, 0.0
    %v231 = vmax.f32 %v181, 0.0
    %v232 = vmax.f32 %v222, 0.0
    %v233 = vmax.f32 %v224, 0.0
    %v234 = vld [vmem:[%s5] sm:$0xff]
    %235 = vrot.lane.b32.xlu0 %v226, 1
    %v236 = vpop.permute.xlu0 %235
    %237 = vrot.lane.b32.xlu0 %v230, 1
    %v238 = vpop.permute.xlu0 %237
    %239 = vrot.lane.b32.xlu0 %v227, 1
    %v240 = vpop.permute.xlu0 %239
    %241 = vrot.lane.b32.xlu0 %v231, 1
    %v242 = vpop.permute.xlu0 %241
    %243 = vrot.lane.b32.xlu0 %v228, 1
    %v244 = vpop.permute.xlu0 %243
    %245 = vrot.lane.b32.xlu0 %v232, 1
    %v246 = vpop.permute.xlu0 %245
    %247 = vrot.lane.b32.xlu0 %v229, 1
    %v248 = vpop.permute.xlu0 %247
    %249 = vrot.lane.b32.xlu0 %v233, 1
    %v250 = vpop.permute.xlu0 %249
    %v251 = vlaneseq
    %v252 = vand.u32 %v251, 127
    %vm253 = vcmp.lt.s32.totalorder %v252, 1
    %v254 = vsel %vm253, %v244, %v248
    %v255 = vsel %vm253, %v246, %v250
    %v256 = vsel %vm253, %v240, %v244
    %v257 = vsel %vm253, %v242, %v246
    %v258 = vsel %vm253, %v236, %v240
    %v259 = vsel %vm253, %v238, %v242
    %v260 = vsel %vm253, %v248, %v236
    %v261 = vsel %vm253, %v250, %v238
    %v263 = vlaneseq
    %v264 = vshrl.u32 %v263, 7
    %v265 = vsub.s32 0, %v264
    %v266 = vrot.slane %v234, %v265
    %v267 = vlaneseq
    %v268 = vshrl.u32 %v267, 7
    %v269 = vsub.s32 2, %v268
    %v270 = vrot.slane %v234, %v269
    %v271 = vlaneseq
    %v272 = vshrl.u32 %v271, 7
    %v273 = vsub.s32 4, %v272
    %v274 = vrot.slane %v234, %v273
    %v275 = vlaneseq
    %v276 = vshrl.u32 %v275, 7
    %v277 = vsub.s32 6, %v276
    %v278 = vrot.slane %v234, %v277
    %v283 = vlaneseq
    %v284 = vshrl.u32 %v283, 7
    %v285 = vsub.s32 0, %v284
    %v286 = vrot.slane %v266, %v285
    %v287 = vlaneseq
    %v288 = vshrl.u32 %v287, 7
    %v289 = vsub.s32 0, %v288
    %v290 = vrot.slane %v270, %v289
    %v291 = vlaneseq
    %v292 = vshrl.u32 %v291, 7
    %v293 = vsub.s32 0, %v292
    %v294 = vrot.slane %v274, %v293
    %v295 = vlaneseq
    %v296 = vshrl.u32 %v295, 7
    %v297 = vsub.s32 0, %v296
    %v298 = vrot.slane %v278, %v297
    %v299 = vmul.f32 %v260, %v286
    %v300 = vmul.f32 %v258, %v290
    %v301 = vmul.f32 %v256, %v294
    %v302 = vmul.f32 %v254, %v298
    %v303 = vmul.f32 %v261, %v286
    %v304 = vmul.f32 %v259, %v290
    %v305 = vmul.f32 %v257, %v294
    %v306 = vmul.f32 %v255, %v298
    %307 = vrot.lane.b32.xlu0 %v226, 127
    %v308 = vpop.permute.xlu0 %307
    %309 = vrot.lane.b32.xlu0 %v230, 127
    %v310 = vpop.permute.xlu0 %309
    %311 = vrot.lane.b32.xlu0 %v227, 127
    %v312 = vpop.permute.xlu0 %311
    %313 = vrot.lane.b32.xlu0 %v231, 127
    %v314 = vpop.permute.xlu0 %313
    %315 = vrot.lane.b32.xlu0 %v228, 127
    %v316 = vpop.permute.xlu0 %315
    %317 = vrot.lane.b32.xlu0 %v232, 127
    %v318 = vpop.permute.xlu0 %317
    %319 = vrot.lane.b32.xlu0 %v229, 127
    %v320 = vpop.permute.xlu0 %319
    %321 = vrot.lane.b32.xlu0 %v233, 127
    %v322 = vpop.permute.xlu0 %321
    %vm323 = vcmp.lt.s32.totalorder %v252, 127
    %v324 = vsel %vm323, %v316, %v320
    %v325 = vsel %vm323, %v318, %v322
    %v326 = vsel %vm323, %v312, %v316
    %v327 = vsel %vm323, %v314, %v318
    %v328 = vsel %vm323, %v308, %v312
    %v329 = vsel %vm323, %v310, %v314
    %v330 = vsel %vm323, %v320, %v308
    %v331 = vsel %vm323, %v322, %v310
    %v332 = vlaneseq
    %v333 = vshrl.u32 %v332, 7
    %v334 = vsub.s32 1, %v333
    %v335 = vrot.slane %v234, %v334
    %v336 = vlaneseq
    %v337 = vshrl.u32 %v336, 7
    %v338 = vsub.s32 3, %v337
    %v339 = vrot.slane %v234, %v338
    %v340 = vlaneseq
    %v341 = vshrl.u32 %v340, 7
    %v342 = vsub.s32 5, %v341
    %v343 = vrot.slane %v234, %v342
    %v344 = vlaneseq
    %v345 = vshrl.u32 %v344, 7
    %v346 = vsub.s32 7, %v345
    %v347 = vrot.slane %v234, %v346
    %v352 = vlaneseq
    %v353 = vshrl.u32 %v352, 7
    %v354 = vsub.s32 1, %v353
    %v355 = vrot.slane %v335, %v354
    %v356 = vlaneseq
    %v357 = vshrl.u32 %v356, 7
    %v358 = vsub.s32 1, %v357
    %v359 = vrot.slane %v339, %v358
    %v360 = vlaneseq
    %v361 = vshrl.u32 %v360, 7
    %v362 = vsub.s32 1, %v361
    %v363 = vrot.slane %v343, %v362
    %v364 = vlaneseq
    %v365 = vshrl.u32 %v364, 7
    %v366 = vsub.s32 1, %v365
    %v367 = vrot.slane %v347, %v366
    %v368 = vmul.f32 %v328, %v355
    %v369 = vmul.f32 %v326, %v359
    %v370 = vmul.f32 %v324, %v363
    %v371 = vmul.f32 %v330, %v367
    %v372 = vmul.f32 %v329, %v355
    %v373 = vmul.f32 %v327, %v359
    %v374 = vmul.f32 %v325, %v363
    %v375 = vmul.f32 %v331, %v367
    %v376 = vpack.c.bf16 %v303, %v299
    %v377 = vpack.c.bf16 %v304, %v300
    %v378 = vpack.c.bf16 %v305, %v301
    %v379 = vpack.c.bf16 %v306, %v302
    %v380 = vpack.c.bf16 %v230, %v226
    %v381 = vpack.c.bf16 %v231, %v227
    %v382 = vpack.c.bf16 %v232, %v228
    %v383 = vpack.c.bf16 %v233, %v229
    %v384 = vpack.c.bf16 %v372, %v368
    %v385 = vpack.c.bf16 %v373, %v369
    %v386 = vpack.c.bf16 %v374, %v370
    %v387 = vpack.c.bf16 %v375, %v371
    %v388 = vld [vmem:[%s3] sm:$0xf]
    %v389 = vld [vmem:[%s3 + $0x4] sm:$0xf]
    %v390 = vld [vmem:[%s3 + $0x8] sm:$0xf]
    %v391 = vld [vmem:[%s3 + $0xc] sm:$0xf]
    %v392 = vld [vmem:[%s4] sm:$0xff]
    %v393 = vld [vmem:[%s4 + $0x8] sm:$0xff]
    %v394 = vld [vmem:[%s4 + $0x10] sm:$0xff]
    %v395 = vld [vmem:[%s4 + $0x18] sm:$0xff]
    %397 = vset.pattern.permute.xlu0 0
    %398 = vperm.xlu0 %397, %v392
    %v399 = vpop.permute.xlu0 %398
    %402 = vset.pattern.permute.xlu0 0
    %403 = vperm.xlu0 %402, %v393
    %v404 = vpop.permute.xlu0 %403
    %407 = vset.pattern.permute.xlu0 0
    %408 = vperm.xlu0 %407, %v394
    %v409 = vpop.permute.xlu0 %408
    %412 = vset.pattern.permute.xlu0 0
    %413 = vperm.xlu0 %412, %v395
    %v414 = vpop.permute.xlu0 %413
    %v420 = vunpack.c.l.b16 %v388
    %v421 = vunpack.c.l.b16 %v389
    %v422 = vunpack.c.l.b16 %v390
    %v423 = vunpack.c.l.b16 %v391
    %v424 = vpack.c.b16 %v421, %v420
    %v425 = vpack.c.b16 %v423, %v422
    %vm426 = vcmask 392192
    %v428 = vsel %vm426, %v424, 0
    %v431 = vsel %vm426, %v425, 0
    %433 = vmatprep.subr.bf16.mxu0 0
    %434 = vmatpush1.bf16.msra.mxu0 0
    %435 = vmatprep.subr.bf16.mxu0 0
    %436 = vmatpush1.bf16.msra.mxu0 0
    %437 = vmatprep.subr.bf16.mxu0 0
    %438 = vmatpush1.bf16.msra.mxu0 0
    %439 = vmatprep.subr.bf16.mxu0 0
    %440 = vmatpush1.bf16.msra.mxu0 0
    %441 = vmatprep.subr.bf16.mxu0 0
    %442 = vmatpush1.bf16.msra.mxu0 0
    %443 = vmatprep.subr.bf16.mxu0 %v385
    %444 = vmatpush1.bf16.msra.mxu0 %v384
    %445 = vmatprep.subr.bf16.mxu0 %v381
    %446 = vmatpush1.bf16.msra.mxu0 %v380
    %447 = vmatprep.subr.bf16.mxu0 %v377
    %448 = vmatpush1.bf16.msra.mxu0 %v376
    %449 = vmatprep.subr.bf16.mxu0 0
    %450 = vmatpush2.bf16.msra.mxu0 0
    %451 = vmatprep.subr.bf16.mxu0 0
    %452 = vmatpush2.bf16.msra.mxu0 0
    %453 = vmatprep.subr.bf16.mxu0 0
    %454 = vmatpush2.bf16.msra.mxu0 0
    %455 = vmatprep.subr.bf16.mxu0 0
    %456 = vmatpush2.bf16.msra.mxu0 0
    %457 = vmatprep.subr.bf16.mxu0 0
    %458 = vmatpush2.bf16.msra.mxu0 0
    %459 = vmatprep.subr.bf16.mxu0 0
    %460 = vmatpush2.bf16.msra.mxu0 0
    %461 = vmatprep.subr.bf16.mxu0 0
    %462 = vmatpush2.bf16.msra.mxu0 0
    %463 = vmatprep.subr.bf16.mxu0 0
    %464 = vmatpush2.bf16.msra.mxu0 0
    %465 = vmatprep.mubr.bf16.mxu0 0
    %466 = vmatmul.mubr.bf16.gmra.mxu0 %v428
    %v467 = vpop.f32.mrf.mxu0
    %v468 = vadd.f32 %v399, %v467
    %v469 = vpop.f32.mrf.mxu0
    %v470 = vadd.f32 %v399, %v469
    %v471 = vpop.f32.mrf.mxu0
    %v472 = vadd.f32 %v404, %v471
    %v473 = vpop.f32.mrf.mxu0
    %v474 = vadd.f32 %v404, %v473
    %475 = vmatprep.mubr.bf16.mxu0 0
    %476 = vmatmul.mubr.bf16.gmra.mxu0 %v431
    %v477 = vpop.f32.mrf.mxu0
    %v478 = vadd.f32 %v409, %v477
    %v479 = vpop.f32.mrf.mxu0
    %v480 = vadd.f32 %v409, %v479
    %v481 = vpop.f32.mrf.mxu0
    %v482 = vadd.f32 %v414, %v481
    %v483 = vpop.f32.mrf.mxu0
    %v484 = vadd.f32 %v414, %v483
    %485 = vdwg.mxu0
    %486 = vmatprep.subr.bf16.mxu0 0
    %487 = vmatpush1.bf16.msra.mxu0 0
    %488 = vmatprep.subr.bf16.mxu0 0
    %489 = vmatpush1.bf16.msra.mxu0 0
    %490 = vmatprep.subr.bf16.mxu0 0
    %491 = vmatpush1.bf16.msra.mxu0 0
    %492 = vmatprep.subr.bf16.mxu0 0
    %493 = vmatpush1.bf16.msra.mxu0 0
    %494 = vmatprep.subr.bf16.mxu0 0
    %495 = vmatpush1.bf16.msra.mxu0 0
    %496 = vmatprep.subr.bf16.mxu0 %v387
    %497 = vmatpush1.bf16.msra.mxu0 %v386
    %498 = vmatprep.subr.bf16.mxu0 %v383
    %499 = vmatpush1.bf16.msra.mxu0 %v382
    %500 = vmatprep.subr.bf16.mxu0 %v379
    %501 = vmatpush1.bf16.msra.mxu0 %v378
    %502 = vmatprep.subr.bf16.mxu0 0
    %503 = vmatpush2.bf16.msra.mxu0 0
    %504 = vmatprep.subr.bf16.mxu0 0
    %505 = vmatpush2.bf16.msra.mxu0 0
    %506 = vmatprep.subr.bf16.mxu0 0
    %507 = vmatpush2.bf16.msra.mxu0 0
    %508 = vmatprep.subr.bf16.mxu0 0
    %509 = vmatpush2.bf16.msra.mxu0 0
    %510 = vmatprep.subr.bf16.mxu0 0
    %511 = vmatpush2.bf16.msra.mxu0 0
    %512 = vmatprep.subr.bf16.mxu0 0
    %513 = vmatpush2.bf16.msra.mxu0 0
    %514 = vmatprep.subr.bf16.mxu0 0
    %515 = vmatpush2.bf16.msra.mxu0 0
    %516 = vmatprep.subr.bf16.mxu0 0
    %517 = vmatpush2.bf16.msra.mxu0 0
    %518 = vmatprep.mubr.bf16.mxu0 0
    %519 = vmatmul.mubr.bf16.gmra.mxu0 %v428
    %v520 = vpop.f32.mrf.mxu0
    %v521 = vadd.f32 %v399, %v520
    %v522 = vpop.f32.mrf.mxu0
    %v523 = vadd.f32 %v399, %v522
    %v524 = vpop.f32.mrf.mxu0
    %v525 = vadd.f32 %v404, %v524
    %v526 = vpop.f32.mrf.mxu0
    %v527 = vadd.f32 %v404, %v526
    %528 = vmatprep.mubr.bf16.mxu0 0
    %529 = vmatmul.mubr.bf16.gmra.mxu0 %v431
    %v530 = vpop.f32.mrf.mxu0
    %v531 = vadd.f32 %v409, %v530
    %v532 = vpop.f32.mrf.mxu0
    %v533 = vadd.f32 %v409, %v532
    %v534 = vpop.f32.mrf.mxu0
    %v535 = vadd.f32 %v414, %v534
    %v536 = vpop.f32.mrf.mxu0
    %v537 = vadd.f32 %v414, %v536
    %538 = vdwg.mxu0
    %v539 = vmax.f32 %v468, 0.0
    %v540 = vmax.f32 %v470, 0.0
    %v541 = vmax.f32 %v521, 0.0
    %v542 = vmax.f32 %v523, 0.0
    %v543 = vmax.f32 %v472, 0.0
    %v544 = vmax.f32 %v474, 0.0
    %v545 = vmax.f32 %v525, 0.0
    %v546 = vmax.f32 %v527, 0.0
    %v547 = vmax.f32 %v478, 0.0
    %v548 = vmax.f32 %v480, 0.0
    %v549 = vmax.f32 %v531, 0.0
    %v550 = vmax.f32 %v533, 0.0
    %v551 = vmax.f32 %v482, 0.0
    %v552 = vmax.f32 %v484, 0.0
    %v553 = vmax.f32 %v535, 0.0
    %v554 = vmax.f32 %v537, 0.0
    %v555 = vld [vmem:[#allocation5] sm:$0xff]
    %v557 = vcombine.high %v555, %v555
    %v559 = vunpack.c.l.s4 1983009808
    %v560 = vunpack.c.0.s8 %v559
    %v561 = vlaneseq
    %v562 = vshrl.u32 %v561, 7
    %v563 = vsub.s32 %v560, %v562
    %v564 = vrot.slane %v555, %v563
    %v566 = vunpack.c.l.s4 1983009808
    %v567 = vunpack.c.0.s8 %v566
    %v568 = vlaneseq
    %v569 = vshrl.u32 %v568, 7
    %v570 = vsub.s32 %v567, %v569
    %v571 = vrot.slane %v557, %v570
    %v572 = vcombine.high %v564, %v564
    %v573 = vcombine.high %v571, %v571
    %578 = vmatprep.subr.mxu0 0.0
    %579 = vmatpush1.xpose.msra.mxu0 0.0
    %580 = vmatprep.subr.mxu0 0.0
    %581 = vmatpush1.xpose.msra.mxu0 0.0
    %582 = vmatprep.subr.mxu0 0.0
    %583 = vmatpush1.xpose.msra.mxu0 0.0
    %584 = vmatprep.subr.mxu0 0.0
    %585 = vmatpush1.xpose.msra.mxu0 0.0
    %586 = vmatprep.subr.mxu0 0.0
    %587 = vmatpush1.xpose.msra.mxu0 0.0
    %588 = vmatprep.subr.mxu0 0.0
    %589 = vmatpush1.xpose.msra.mxu0 0.0
    %590 = vmatprep.subr.mxu0 0.0
    %591 = vmatpush1.xpose.msra.mxu0 0.0
    %592 = vmatprep.subr.mxu0 0.0
    %593 = vmatpush1.xpose.msra.mxu0 0.0
    %594 = vmatprep.subr.mxu0 0.0
    %595 = vmatpush1.xpose.msra.mxu0 0.0
    %596 = vmatprep.subr.mxu0 0.0
    %597 = vmatpush1.xpose.msra.mxu0 0.0
    %598 = vmatprep.subr.mxu0 0.0
    %599 = vmatpush1.xpose.msra.mxu0 0.0
    %600 = vmatprep.subr.mxu0 0.0
    %601 = vmatpush1.xpose.msra.mxu0 0.0
    %602 = vmatprep.subr.mxu0 %v552
    %603 = vmatpush1.xpose.msra.mxu0 %v551
    %604 = vmatprep.subr.mxu0 %v548
    %605 = vmatpush1.xpose.msra.mxu0 %v547
    %606 = vmatprep.subr.mxu0 %v544
    %607 = vmatpush1.xpose.msra.mxu0 %v543
    %608 = vmatprep.subr.mxu0 %v540
    %609 = vmatpush1.xpose.msra.mxu0 %v539
    %610 = vmatprep.subr.mxu0 0.0
    %611 = vmatpush2.xpose.msra.mxu0 0.0
    %612 = vmatprep.subr.mxu0 0.0
    %613 = vmatpush2.xpose.msra.mxu0 0.0
    %614 = vmatprep.subr.mxu0 0.0
    %615 = vmatpush2.xpose.msra.mxu0 0.0
    %616 = vmatprep.subr.mxu0 0.0
    %617 = vmatpush2.xpose.msra.mxu0 0.0
    %618 = vmatprep.subr.mxu0 0.0
    %619 = vmatpush2.xpose.msra.mxu0 0.0
    %620 = vmatprep.subr.mxu0 0.0
    %621 = vmatpush2.xpose.msra.mxu0 0.0
    %622 = vmatprep.subr.mxu0 0.0
    %623 = vmatpush2.xpose.msra.mxu0 0.0
    %624 = vmatprep.subr.mxu0 0.0
    %625 = vmatpush2.xpose.msra.mxu0 0.0
    %626 = vmatprep.subr.mxu0 0.0
    %627 = vmatpush2.xpose.msra.mxu0 0.0
    %628 = vmatprep.subr.mxu0 0.0
    %629 = vmatpush2.xpose.msra.mxu0 0.0
    %630 = vmatprep.subr.mxu0 0.0
    %631 = vmatpush2.xpose.msra.mxu0 0.0
    %632 = vmatprep.subr.mxu0 0.0
    %633 = vmatpush2.xpose.msra.mxu0 0.0
    %634 = vmatprep.subr.mxu0 0.0
    %635 = vmatpush2.xpose.msra.mxu0 0.0
    %636 = vmatprep.subr.mxu0 0.0
    %637 = vmatpush2.xpose.msra.mxu0 0.0
    %638 = vmatprep.subr.mxu0 0.0
    %639 = vmatpush2.xpose.msra.mxu0 0.0
    %640 = vmatprep.subr.mxu0 0.0
    %641 = vmatpush2.xpose.msra.mxu0 0.0
    %642 = vmatprep.mubr.f32.mxu0 %v572
    %643 = vmatmul.mubr.f32.gmra.mxu0 %v564
    %v644 = vpop.f32.mrf.mxu0
    %v645 = vadd.f32 0.0, %v644
    %v646 = vpop.f32.mrf.mxu0
    %647 = vdwg.mxu0
    %648 = vmatprep.subr.mxu0 0.0
    %649 = vmatpush1.xpose.msra.mxu0 0.0
    %650 = vmatprep.subr.mxu0 0.0
    %651 = vmatpush1.xpose.msra.mxu0 0.0
    %652 = vmatprep.subr.mxu0 0.0
    %653 = vmatpush1.xpose.msra.mxu0 0.0
    %654 = vmatprep.subr.mxu0 0.0
    %655 = vmatpush1.xpose.msra.mxu0 0.0
    %656 = vmatprep.subr.mxu0 0.0
    %657 = vmatpush1.xpose.msra.mxu0 0.0
    %658 = vmatprep.subr.mxu0 0.0
    %659 = vmatpush1.xpose.msra.mxu0 0.0
    %660 = vmatprep.subr.mxu0 0.0
    %661 = vmatpush1.xpose.msra.mxu0 0.0
    %662 = vmatprep.subr.mxu0 0.0
    %663 = vmatpush1.xpose.msra.mxu0 0.0
    %664 = vmatprep.subr.mxu0 0.0
    %665 = vmatpush1.xpose.msra.mxu0 0.0
    %666 = vmatprep.subr.mxu0 0.0
    %667 = vmatpush1.xpose.msra.mxu0 0.0
    %668 = vmatprep.subr.mxu0 0.0
    %669 = vmatpush1.xpose.msra.mxu0 0.0
    %670 = vmatprep.subr.mxu0 0.0
    %671 = vmatpush1.xpose.msra.mxu0 0.0
    %672 = vmatprep.subr.mxu0 %v554
    %673 = vmatpush1.xpose.msra.mxu0 %v553
    %674 = vmatprep.subr.mxu0 %v550
    %675 = vmatpush1.xpose.msra.mxu0 %v549
    %676 = vmatprep.subr.mxu0 %v546
    %677 = vmatpush1.xpose.msra.mxu0 %v545
    %678 = vmatprep.subr.mxu0 %v542
    %679 = vmatpush1.xpose.msra.mxu0 %v541
    %680 = vmatprep.subr.mxu0 0.0
    %681 = vmatpush2.xpose.msra.mxu0 0.0
    %682 = vmatprep.subr.mxu0 0.0
    %683 = vmatpush2.xpose.msra.mxu0 0.0
    %684 = vmatprep.subr.mxu0 0.0
    %685 = vmatpush2.xpose.msra.mxu0 0.0
    %686 = vmatprep.subr.mxu0 0.0
    %687 = vmatpush2.xpose.msra.mxu0 0.0
    %688 = vmatprep.subr.mxu0 0.0
    %689 = vmatpush2.xpose.msra.mxu0 0.0
    %690 = vmatprep.subr.mxu0 0.0
    %691 = vmatpush2.xpose.msra.mxu0 0.0
    %692 = vmatprep.subr.mxu0 0.0
    %693 = vmatpush2.xpose.msra.mxu0 0.0
    %694 = vmatprep.subr.mxu0 0.0
    %695 = vmatpush2.xpose.msra.mxu0 0.0
    %696 = vmatprep.subr.mxu0 0.0
    %697 = vmatpush2.xpose.msra.mxu0 0.0
    %698 = vmatprep.subr.mxu0 0.0
    %699 = vmatpush2.xpose.msra.mxu0 0.0
    %700 = vmatprep.subr.mxu0 0.0
    %701 = vmatpush2.xpose.msra.mxu0 0.0
    %702 = vmatprep.subr.mxu0 0.0
    %703 = vmatpush2.xpose.msra.mxu0 0.0
    %704 = vmatprep.subr.mxu0 0.0
    %705 = vmatpush2.xpose.msra.mxu0 0.0
    %706 = vmatprep.subr.mxu0 0.0
    %707 = vmatpush2.xpose.msra.mxu0 0.0
    %708 = vmatprep.subr.mxu0 0.0
    %709 = vmatpush2.xpose.msra.mxu0 0.0
    %710 = vmatprep.subr.mxu0 0.0
    %711 = vmatpush2.xpose.msra.mxu0 0.0
    %712 = vmatprep.mubr.f32.mxu0 %v573
    %713 = vmatmul.mubr.f32.gmra.mxu0 %v571
    %v714 = vpop.f32.mrf.mxu0
    %v715 = vadd.f32 %v645, %v714
    %v716 = vpop.f32.mrf.mxu0
    %717 = vdwg.mxu0
    %v718 = vld [vmem:[#allocation7] sm:$0xff]
    %v719 = vld [vmem:[#allocation7 + $0x8] sm:$0xff]
    %v720 = vld [vmem:[#allocation7 + $0x10] sm:$0xff]
    %v721 = vld [vmem:[#allocation7 + $0x18] sm:$0xff]
    %v722 = vld [vmem:[%s8] sm:$0x1]
    %v724 = vlaneseq
    %v725 = vshrl.u32 %v724, 7
    %v726 = vsub.s32 0, %v725
    %v727 = vrot.slane %v722, %v726
    %vm729 = vcmask 261120
    %v731 = vsel %vm729, %v715, 0
    %733 = vmatprep.subr.mxu0 0.0
    %734 = vmatpush1.msra.mxu0 0.0
    %735 = vmatprep.subr.mxu0 0.0
    %736 = vmatpush1.msra.mxu0 0.0
    %737 = vmatprep.subr.mxu0 0.0
    %738 = vmatpush1.msra.mxu0 0.0
    %739 = vmatprep.subr.mxu0 0.0
    %740 = vmatpush1.msra.mxu0 0.0
    %741 = vmatprep.subr.mxu0 0.0
    %742 = vmatpush1.msra.mxu0 0.0
    %743 = vmatprep.subr.mxu0 0.0
    %744 = vmatpush1.msra.mxu0 0.0
    %745 = vmatprep.subr.mxu0 0.0
    %746 = vmatpush1.msra.mxu0 0.0
    %747 = vmatprep.subr.mxu0 0.0
    %748 = vmatpush1.msra.mxu0 0.0
    %749 = vmatprep.subr.mxu0 0.0
    %750 = vmatpush1.msra.mxu0 0.0
    %751 = vmatprep.subr.mxu0 0.0
    %752 = vmatpush1.msra.mxu0 0.0
    %753 = vmatprep.subr.mxu0 0.0
    %754 = vmatpush1.msra.mxu0 0.0
    %755 = vmatprep.subr.mxu0 0.0
    %756 = vmatpush1.msra.mxu0 0.0
    %757 = vmatprep.subr.mxu0 0.0
    %758 = vmatpush1.msra.mxu0 %v721
    %759 = vmatprep.subr.mxu0 0.0
    %760 = vmatpush1.msra.mxu0 %v720
    %761 = vmatprep.subr.mxu0 0.0
    %762 = vmatpush1.msra.mxu0 %v719
    %763 = vmatprep.subr.mxu0 0.0
    %764 = vmatpush1.msra.mxu0 %v718
    %765 = vmatprep.subr.mxu0 0.0
    %766 = vmatpush2.msra.mxu0 0.0
    %767 = vmatprep.subr.mxu0 0.0
    %768 = vmatpush2.msra.mxu0 0.0
    %769 = vmatprep.subr.mxu0 0.0
    %770 = vmatpush2.msra.mxu0 0.0
    %771 = vmatprep.subr.mxu0 0.0
    %772 = vmatpush2.msra.mxu0 0.0
    %773 = vmatprep.subr.mxu0 0.0
    %774 = vmatpush2.msra.mxu0 0.0
    %775 = vmatprep.subr.mxu0 0.0
    %776 = vmatpush2.msra.mxu0 0.0
    %777 = vmatprep.subr.mxu0 0.0
    %778 = vmatpush2.msra.mxu0 0.0
    %779 = vmatprep.subr.mxu0 0.0
    %780 = vmatpush2.msra.mxu0 0.0
    %781 = vmatprep.subr.mxu0 0.0
    %782 = vmatpush2.msra.mxu0 0.0
    %783 = vmatprep.subr.mxu0 0.0
    %784 = vmatpush2.msra.mxu0 0.0
    %785 = vmatprep.subr.mxu0 0.0
    %786 = vmatpush2.msra.mxu0 0.0
    %787 = vmatprep.subr.mxu0 0.0
    %788 = vmatpush2.msra.mxu0 0.0
    %789 = vmatprep.subr.mxu0 0.0
    %790 = vmatpush2.msra.mxu0 0.0
    %791 = vmatprep.subr.mxu0 0.0
    %792 = vmatpush2.msra.mxu0 0.0
    %793 = vmatprep.subr.mxu0 0.0
    %794 = vmatpush2.msra.mxu0 0.0
    %795 = vmatprep.subr.mxu0 0.0
    %796 = vmatpush2.msra.mxu0 0.0
    %797 = vmatprep.mubr.f32.mxu0 0.0
    %798 = vmatmul.mubr.f32.gmra.mxu0 %v731
    %v799 = vpop.f32.mrf.mxu0
    %v800 = vadd.f32 %v727, %v799
    %v801 = vpop.f32.mrf.mxu0
    %802 = vdwg.mxu0
    %v803 = vld [vmem:[#allocation8] sm:$0xff]
    %v804 = vld [vmem:[#allocation8 + $0x8] sm:$0xff]
    %v805 = vld [vmem:[#allocation8 + $0x10] sm:$0xff]
    %v806 = vld [vmem:[#allocation8 + $0x18] sm:$0xff]
    %v807 = vld [vmem:[#allocation8 + $0x20] sm:$0xff]
    %v808 = vld [vmem:[#allocation8 + $0x28] sm:$0xff]
    %v809 = vld [vmem:[#allocation8 + $0x30] sm:$0xff]
    %v810 = vld [vmem:[#allocation8 + $0x38] sm:$0xff]
    %v811 = vld [vmem:[#allocation8 + $0x40] sm:$0xff]
    %v812 = vld [vmem:[#allocation8 + $0x48] sm:$0xff]
    %v813 = vld [vmem:[#allocation8 + $0x50] sm:$0xff]
    %v814 = vld [vmem:[#allocation8 + $0x58] sm:$0xff]
    %v815 = vld [vmem:[#allocation8 + $0x60] sm:$0xff]
    %v816 = vld [vmem:[#allocation8 + $0x68] sm:$0xff]
    %v817 = vld [vmem:[#allocation8 + $0x70] sm:$0xff]
    %v818 = vld [vmem:[#allocation8 + $0x78] sm:$0xff]
    %v819 = vld [vmem:[%s10] sm:$0x1]
    %v821 = vlaneseq
    %v822 = vshrl.u32 %v821, 7
    %v823 = vsub.s32 0, %v822
    %v824 = vrot.slane %v819, %v823
    %826 = vmatprep.subr.mxu0 0.0
    %827 = vmatpush1.msra.mxu0 %v818
    %828 = vmatprep.subr.mxu0 0.0
    %829 = vmatpush1.msra.mxu0 %v817
    %830 = vmatprep.subr.mxu0 0.0
    %831 = vmatpush1.msra.mxu0 %v816
    %832 = vmatprep.subr.mxu0 0.0
    %833 = vmatpush1.msra.mxu0 %v815
    %834 = vmatprep.subr.mxu0 0.0
    %835 = vmatpush1.msra.mxu0 %v814
    %836 = vmatprep.subr.mxu0 0.0
    %837 = vmatpush1.msra.mxu0 %v813
    %838 = vmatprep.subr.mxu0 0.0
    %839 = vmatpush1.msra.mxu0 %v812
    %840 = vmatprep.subr.mxu0 0.0
    %841 = vmatpush1.msra.mxu0 %v811
    %842 = vmatprep.subr.mxu0 0.0
    %843 = vmatpush1.msra.mxu0 %v810
    %844 = vmatprep.subr.mxu0 0.0
    %845 = vmatpush1.msra.mxu0 %v809
    %846 = vmatprep.subr.mxu0 0.0
    %847 = vmatpush1.msra.mxu0 %v808
    %848 = vmatprep.subr.mxu0 0.0
    %849 = vmatpush1.msra.mxu0 %v807
    %850 = vmatprep.subr.mxu0 0.0
    %851 = vmatpush1.msra.mxu0 %v806
    %852 = vmatprep.subr.mxu0 0.0
    %853 = vmatpush1.msra.mxu0 %v805
    %854 = vmatprep.subr.mxu0 0.0
    %855 = vmatpush1.msra.mxu0 %v804
    %856 = vmatprep.subr.mxu0 0.0
    %857 = vmatpush1.msra.mxu0 %v803
    %858 = vmatprep.subr.mxu0 0.0
    %859 = vmatpush2.msra.mxu0 0.0
    %860 = vmatprep.subr.mxu0 0.0
    %861 = vmatpush2.msra.mxu0 0.0
    %862 = vmatprep.subr.mxu0 0.0
    %863 = vmatpush2.msra.mxu0 0.0
    %864 = vmatprep.subr.mxu0 0.0
    %865 = vmatpush2.msra.mxu0 0.0
    %866 = vmatprep.subr.mxu0 0.0
    %867 = vmatpush2.msra.mxu0 0.0
    %868 = vmatprep.subr.mxu0 0.0
    %869 = vmatpush2.msra.mxu0 0.0
    %870 = vmatprep.subr.mxu0 0.0
    %871 = vmatpush2.msra.mxu0 0.0
    %872 = vmatprep.subr.mxu0 0.0
    %873 = vmatpush2.msra.mxu0 0.0
    %874 = vmatprep.subr.mxu0 0.0
    %875 = vmatpush2.msra.mxu0 0.0
    %876 = vmatprep.subr.mxu0 0.0
    %877 = vmatpush2.msra.mxu0 0.0
    %878 = vmatprep.subr.mxu0 0.0
    %879 = vmatpush2.msra.mxu0 0.0
    %880 = vmatprep.subr.mxu0 0.0
    %881 = vmatpush2.msra.mxu0 0.0
    %882 = vmatprep.subr.mxu0 0.0
    %883 = vmatpush2.msra.mxu0 0.0
    %884 = vmatprep.subr.mxu0 0.0
    %885 = vmatpush2.msra.mxu0 0.0
    %886 = vmatprep.subr.mxu0 0.0
    %887 = vmatpush2.msra.mxu0 0.0
    %888 = vmatprep.subr.mxu0 0.0
    %889 = vmatpush2.msra.mxu0 0.0
    %890 = vmatprep.mubr.f32.mxu0 0.0
    %891 = vmatmul.mubr.f32.gmra.mxu0 %v800
    %v892 = vpop.f32.mrf.mxu0
    %v893 = vadd.f32 %v824, %v892
    %v894 = vpop.f32.mrf.mxu0
    %895 = vdwg.mxu0
    %vm896 = vcmask 1041408
    %v897 = vsel %vm896, %v893, -inf
    %898 = vmax.xlane.f32.xlu0 %v897
    %v899 = vpop.xlane.xlu0 %898
    %v900 = vsub.f32 %v893, %v899
    %v901 = vmul.f32 %v900, 1.442695
    %v902 = vpow.pop %v901
    %v903 = vsel %vm896, %v902, 0.0
    %904 = vadd.xlane.f32.xlu0 %v903
    %v905 = vpop.xlane.xlu0 %904
    %v906 = vlog2.pop %v905
    %v907 = vmul.f32 %v906, 0.6931472
    %v908 = vsub.f32 %v900, %v907
    %909 = vst [vmem:[#allocation10] sm:$0x3] %v908
    // Predicated region
    $region62: #{tpu_custom_call.1} parent=1 // pred_check
      _
    $region63: #{tpu_custom_call.1} parent=1 // pred_check_branch
      %911 = sbr.rel (0) target = $region65
    $region64: #{tpu_custom_call.1} parent=1 // pred_region
      %s913 = ssub.s32 32, 32
      %914 = vsyncadd [#allocation4], %s913
      %s916 = sshll.u32 [#allocation10], 4
      %s917 = int_to_ptr.vmem [resolvable:$true] %s916
      %919 = dma.vmem_to_hbm [thread:$0]  %s917, 32, %s11, [#allocation4]
    $region65: #{tpu_custom_call.1} parent=1 // pred_fallthru
      _
    // Predicated region
    $region66: #{tpu_custom_call.1} parent=1 // pred_check
      _
    $region67: #{tpu_custom_call.1} parent=1 // pred_check_branch
      %921 = sbr.rel (0) target = $region69
    $region68: #{tpu_custom_call.1} parent=1 // pred_region
      %922 = dma.done [#allocation4], 32
    $region69: #{tpu_custom_call.1} parent=1 // pred_fallthru
      _
    %923 = vsyncpa [#allocation3], 1
    %924 = vsyncpa [#allocation6], 1
    %925 = vsyncpa [#allocation9], 1
    %926 = vsyncpa [#allocation4], 1

</llo_original>
